<compile_context>
chip_gen: v7x
topology: tpu7x:2x2x1
jax: 0.10.0
libtpu: 0.0.40
codegen_flags: <defaults>
</compile_context>

<pallas_src>
import jax
import jax.numpy as jnp
from jax import lax
from jax.experimental import pallas as pl
from jax.experimental.pallas import tpu as pltpu

LANE = 128
SUBLANE = 8


def _round_up(x, m):
    return ((x + m - 1) // m) * m


def _gru_recurrence_kernel(gi_ref,       # (Tc, 3Hp) f32  precomputed x@W_ih^T + b_ih (this chunk)
                           h0_ref,       # (1, Hp)   f32  initial hidden (resident)
                           whh_ref,      # (Hp, 3Hp) f32  transposed recurrent weights (resident)
                           bhh_ref,      # (1, 3Hp)  f32  recurrent bias (resident)
                           out_ref,      # (Tc, Hp)  f32  per-step hidden states (this chunk)
                           h_scratch):   # (1, Hp)   f32  hidden carried across chunks
    c = pl.program_id(0)
    Hp = h_scratch.shape[-1]
    Tc = out_ref.shape[0]

    @pl.when(c == 0)
    def _():
        h_scratch[...] = h0_ref[...]

    # Resident operands: load once per chunk, reuse for every timestep.
    whh = whh_ref[...]
    bhh = bhh_ref[...]

    def step(t, h):
        gi = gi_ref[pl.ds(t, 1), :]                                   # (1, 3Hp)
        gh = jnp.dot(h, whh, preferred_element_type=jnp.float32) + bhh

        # Gate order [r, z, n]; each gate lane-aligned at a multiple of Hp.
        i_r, i_z, i_n = gi[:, 0:Hp], gi[:, Hp:2 * Hp], gi[:, 2 * Hp:3 * Hp]
        h_r, h_z, h_n = gh[:, 0:Hp], gh[:, Hp:2 * Hp], gh[:, 2 * Hp:3 * Hp]

        r = jax.nn.sigmoid(i_r + h_r)
        z = jax.nn.sigmoid(i_z + h_z)
        n = jnp.tanh(i_n + r * h_n)
        h_new = (1.0 - z) * n + z * h          # padded lanes stay exactly 0

        out_ref[pl.ds(t, 1), :] = h_new
        return h_new

    h_final = lax.fori_loop(0, Tc, step, h_scratch[...])
    h_scratch[...] = h_final                   # carry to the next chunk


def encoder_rnn_forward_seq(tokens, hidden, kparams, *, max_chunk=256):
    """Encode a whole token sequence with ONE pallas_call.

    tokens: (T,) int32 token ids.
    hidden: (1, 1, H) f32 initial hidden state.
    Returns (outputs, hidden_new): (T, 1, H) per-step GRU outputs and (1, 1, H)
    final hidden (outputs[-1] == hidden_new, as in torch for seq-len inputs)."""
    emb = kparams["embedding"]        # (V, Hp)   f32
    wih = kparams["w_ih_t"]           # (Hp, 3Hp) f32
    whh = kparams["w_hh_t"]           # (Hp, 3Hp) f32
    bih = kparams["b_ih"]             # (1, 3Hp)  f32
    bhh = kparams["b_hh"]             # (1, 3Hp)  f32
    H = kparams["hidden_size"]
    V, Hp = emb.shape
    T = int(tokens.shape[0])

    # Untrusted ids would otherwise read a neighbouring embedding row.
    tokens = jnp.clip(tokens.astype(jnp.int32), 0, V - 1)

    # ---- Hoisted input projection (one big matmul, runs in XLA) -------------
    x = emb[tokens]                                           # (T, Hp)
    gi = jnp.dot(x, wih, preferred_element_type=jnp.float32) + bih   # (T, 3Hp)

    # ---- Chunk the timeline: Tc steps per grid step (Tc multiple of 8) ------
    n_chunks = max(1, -(-T // max_chunk))
    Tc = _round_up(-(-T // n_chunks), SUBLANE)
    T_pad = Tc * n_chunks
    if T_pad != T:
        gi = jnp.pad(gi, ((0, T_pad - T), (0, 0)))            # pad steps discarded

    h0 = jnp.zeros((1, Hp), jnp.float32).at[:, :H].set(hidden.reshape(1, H))

    # Explicit VMEM budget: resident weights + double-buffered streamed blocks.
    # Cap at 48 MiB so v7x (64 MiB physical) keeps compiler-scratch headroom.
    resident = whh.nbytes + bhh.nbytes + h0.nbytes
    streamed = (Tc * 3 * Hp + Tc * Hp) * 4
    vmem_limit = int(min(48 << 20, max(4 << 20, 2 * (resident + streamed) + (1 << 20))))

    out = pl.pallas_call(
        _gru_recurrence_kernel,
        out_shape=jax.ShapeDtypeStruct((T_pad, Hp), jnp.float32),
        grid_spec=pltpu.PrefetchScalarGridSpec(
            num_scalar_prefetch=0,
            grid=(n_chunks,),
            in_specs=[
                pl.BlockSpec((Tc, 3 * Hp), lambda c: (c, 0)),      # streamed gi chunk
                pl.BlockSpec((1, Hp), lambda c: (0, 0)),           # resident h0
                pl.BlockSpec((Hp, 3 * Hp), lambda c: (0, 0)),      # resident W_hh^T
                pl.BlockSpec((1, 3 * Hp), lambda c: (0, 0)),       # resident b_hh
            ],
            out_specs=pl.BlockSpec((Tc, Hp), lambda c: (c, 0)),
            scratch_shapes=[pltpu.VMEM((1, Hp), jnp.float32)],
        ),
        compiler_params=pltpu.CompilerParams(
            dimension_semantics=("arbitrary",),     # recurrence: sequential grid
            vmem_limit_bytes=vmem_limit,
        ),
    )(gi, h0, whh, bhh)

    outputs = out[:T, :H].reshape(T, 1, H)
    hidden_new = out[T - 1:T, :H].reshape(1, 1, H)
    return outputs, hidden_new


def encoder_rnn_forward(token, hidden, kparams):
    """Single-step forward matching torch EncoderRNN.forward(input, hidden):
    returns (output, hidden), each (1, 1, H) with identical values.
    NOTE: driving a long decode loop through this path re-DMAs the resident
    weights every token; prefer encoder_rnn_forward_seq for sequences."""
    token = jnp.asarray(token, jnp.int32).reshape((1,))
    outs, h_new = encoder_rnn_forward_seq(token, hidden, kparams)
    return outs.reshape(1, 1, -1), h_new


def init_params(key, input_size, hidden_size):
    """Deterministic synthetic parameters in the torch layout."""
    H = hidden_size
    k_emb, k_wih, k_whh, k_bih, k_bhh = jax.random.split(key, 5)
    bound = 1.0 / jnp.sqrt(jnp.float32(H))
    u = lambda k, shape: jax.random.uniform(k, shape, jnp.float32, -bound, bound)
    return {
        "embedding": jax.random.normal(k_emb, (input_size, H), jnp.float32),
        "w_ih": u(k_wih, (3 * H, H)),     # torch weight_ih_l0, gate order [r, z, n]
        "w_hh": u(k_whh, (3 * H, H)),     # torch weight_hh_l0
        "b_ih": u(k_bih, (3 * H,)),
        "b_hh": u(k_bhh, (3 * H,)),
    }


def prepare_params(params):
    """Transpose and lane-pad (each gate -> Hp = 128*ceil(H/128) lanes), f32.
    Pad columns are zero-filled; with a zero-padded h0 the pad lanes of the
    hidden state stay exactly 0 through every step."""
    emb = params["embedding"]
    V, H = emb.shape
    Hp = _round_up(H, LANE)

    emb_p = jnp.zeros((V, Hp), jnp.float32).at[:, :H].set(emb)

    def pack_w(w):   # (3H, H) torch layout -> (Hp, 3Hp) transposed, padded
        wp = jnp.zeros((Hp, 3 * Hp), jnp.float32)
        for g in range(3):
            wp = wp.at[:H, g * Hp:g * Hp + H].set(w[g * H:(g + 1) * H, :].T)
        return wp

    def pack_b(b):   # (3H,) -> (1, 3Hp)
        bp = jnp.zeros((1, 3 * Hp), jnp.float32)
        for g in range(3):
            bp = bp.at[0, g * Hp:g * Hp + H].set(b[g * H:(g + 1) * H])
        return bp

    return {
        "embedding": emb_p,
        "w_ih_t": pack_w(params["w_ih"]),
        "w_hh_t": pack_w(params["w_hh"]),
        "b_ih": pack_b(params["b_ih"]),
        "b_hh": pack_b(params["b_hh"]),
        "hidden_size": H,
    }


def gru_reference(tokens, hidden, params):
    """Pure f32 JAX reference in the original torch layout (no packing)."""
    H = params["w_hh"].shape[1]
    emb, wih, whh = params["embedding"], params["w_ih"], params["w_hh"]
    bih, bhh = params["b_ih"], params["b_hh"]
    h = hidden.reshape(1, H).astype(jnp.float32)
    outs = []
    for t in range(int(tokens.shape[0])):
        x = emb[tokens[t]][None, :]
        gi = x @ wih.T + bih
        gh = h @ whh.T + bhh
        i_r, i_z, i_n = jnp.split(gi, 3, axis=1)
        h_r, h_z, h_n = jnp.split(gh, 3, axis=1)
        r = jax.nn.sigmoid(i_r + h_r)
        z = jax.nn.sigmoid(i_z + h_z)
        n = jnp.tanh(i_n + r * h_n)
        h = (1.0 - z) * n + z * h
        outs.append(h)
    outs = jnp.stack(outs, 0)                 # (T, 1, H)
    return outs, h.reshape(1, 1, H)


if __name__ == "__main__":
    input_size = 16      # vocab size
    hidden_size = 32
    seq_len = 8

    key = jax.random.PRNGKey(0)
    k_params, k_tok, k_tok2 = jax.random.split(key, 3)

    params = init_params(k_params, input_size, hidden_size)
    kparams = prepare_params(params)

    tokens = jax.random.randint(k_tok, (seq_len,), 0, input_size, dtype=jnp.int32)
    hidden0 = jnp.zeros((1, 1, hidden_size), jnp.float32)   # initHidden()

    # Whole-sequence encode in a single kernel launch (single chunk).
    outputs, hidden_final = encoder_rnn_forward_seq(tokens, hidden0, kparams)
    jax.block_until_ready((outputs, hidden_final))
    assert outputs.shape == (seq_len, 1, hidden_size)
    assert hidden_final.shape == (1, 1, hidden_size)

    # Single-step call matching the torch forward signature.
    out1, hid1 = encoder_rnn_forward(tokens[:1], hidden0, kparams)
    jax.block_until_ready((out1, hid1))
    assert out1.shape == (1, 1, hidden_size) and hid1.shape == (1, 1, hidden_size)

    # Validate against a true f32 reference (tolerance covers MXU matmul
    # rounding inside the kernel; semantic bugs would be O(0.1) off).
    ref_out, ref_hid = gru_reference(tokens, hidden0, params)
    assert jnp.allclose(outputs, ref_out, atol=5e-3, rtol=5e-3)
    assert jnp.allclose(hidden_final, ref_hid, atol=5e-3, rtol=5e-3)
    assert jnp.allclose(out1, ref_out[:1], atol=5e-3, rtol=5e-3)

    # Multi-chunk path (chunk carry + time padding) at small shapes:
    # T=20 with max_chunk=8 -> 3 chunks of Tc=8 (4 padded steps discarded).
    tokens2 = jax.random.randint(k_tok2, (20,), 0, input_size, dtype=jnp.int32)
    out2, hid2 = encoder_rnn_forward_seq(tokens2, hidden0, kparams, max_chunk=8)
    jax.block_until_ready((out2, hid2))
    ref_out2, ref_hid2 = gru_reference(tokens2, hidden0, params)
    assert jnp.allclose(out2, ref_out2, atol=5e-3, rtol=5e-3)
    assert jnp.allclose(hid2, ref_hid2, atol=5e-3, rtol=5e-3)

    print("KERNEL_OK")
</pallas_src>

<mosaic_0001>
module attributes {stable_mosaic.version = 11 : i64} {
  func.func @_gru_recurrence_kernel(%arg0: i32, %arg1: memref<8x384xf32, #tpu.memory_space<vmem>>, %arg2: memref<1x128xf32, #tpu.memory_space<vmem>>, %arg3: memref<128x384xf32, #tpu.memory_space<vmem>>, %arg4: memref<1x384xf32, #tpu.memory_space<vmem>>, %arg5: memref<8x128xf32, #tpu.memory_space<vmem>>, %arg6: memref<1x128xf32, #tpu.memory_space<vmem>>) attributes {dimension_semantics = [#tpu.dimension_semantics<arbitrary>], iteration_bounds = array<i64: 1>, scalar_prefetch = 0 : i64, scratch_operands = 1 : i64, tpu.core_type = #tpu.core_type<tc>, window_params = [{transform_indices = @transform_0, window_bounds = array<i64: 8, 384>}, {pipeline_mode = #tpu.pipeline_mode<synchronous>, transform_indices = @transform_1, window_bounds = array<i64: 1, 128>}, {pipeline_mode = #tpu.pipeline_mode<synchronous>, transform_indices = @transform_2, window_bounds = array<i64: 128, 384>}, {pipeline_mode = #tpu.pipeline_mode<synchronous>, transform_indices = @transform_3, window_bounds = array<i64: 1, 384>}, {transform_indices = @transform_4, window_bounds = array<i64: 8, 128>}]} {
    %c0_i32 = arith.constant 0 : i32
    %0 = arith.cmpi eq, %arg0, %c0_i32 : i32
    %1 = arith.extui %0 : i1 to i32
    %c0_i32_0 = arith.constant 0 : i32
    %2 = arith.cmpi ne, %1, %c0_i32_0 : i32
    scf.if %2 {
      %c0_10 = arith.constant 0 : index
      %c0_11 = arith.constant 0 : index
      %9 = vector.load %arg2[%c0_10, %c0_11] : memref<1x128xf32, #tpu.memory_space<vmem>>, vector<1x128xf32>
      %c0_12 = arith.constant 0 : index
      %c0_13 = arith.constant 0 : index
      %10 = vector.load %arg6[%c0_12, %c0_13] : memref<1x128xf32, #tpu.memory_space<vmem>>, vector<1x128xf32>
      tpu.vector_store %arg6[%c0_12, %c0_13], %9 {strides = array<i32>} : memref<1x128xf32, #tpu.memory_space<vmem>>, vector<1x128xf32>,
    } else {
    }
    %c0 = arith.constant 0 : index
    %c0_1 = arith.constant 0 : index
    %3 = vector.load %arg3[%c0, %c0_1] : memref<128x384xf32, #tpu.memory_space<vmem>>, vector<128x384xf32>
    %c0_2 = arith.constant 0 : index
    %c0_3 = arith.constant 0 : index
    %4 = vector.load %arg4[%c0_2, %c0_3] : memref<1x384xf32, #tpu.memory_space<vmem>>, vector<1x384xf32>
    %c0_4 = arith.constant 0 : index
    %c0_5 = arith.constant 0 : index
    %5 = vector.load %arg6[%c0_4, %c0_5] : memref<1x128xf32, #tpu.memory_space<vmem>>, vector<1x128xf32>
    %c0_i32_6 = arith.constant 0 : i32
    %c8_i32 = arith.constant 8 : i32
    %6 = arith.addi %c0_i32_6, %c8_i32 : i32
    %c1_i32 = arith.constant 1 : i32
    %7 = scf.for %arg7 = %c0_i32_6 to %6 step %c1_i32 iter_args(%arg8 = %5) -> (vector<1x128xf32>)  : i32 {
      %9 = arith.index_cast %arg7 : i32 to index
      %c0_10 = arith.constant 0 : index
      %10 = vector.load %arg1[%9, %c0_10] : memref<8x384xf32, #tpu.memory_space<vmem>>, vector<1x384xf32>
      %cst = arith.constant dense<0.000000e+00> : vector<1x384xf32>
      %11 = tpu.matmul %arg8, %3, %cst {dimension_numbers = #tpu.dot_dimension_numbers<[1], [0], [0], [1], [0, 0, 1, 1], [], []>} : vector<1x128xf32>, vector<128x384xf32>, vector<1x384xf32> -> vector<1x384xf32>
      %12 = arith.addf %11, %4 : vector<1x384xf32>
      %13 = vector.extract_strided_slice %10 {offsets = [0, 0], sizes = [1, 128], strides = [1, 1]} : vector<1x384xf32> to vector<1x128xf32>
      %14 = vector.extract_strided_slice %10 {offsets = [0, 128], sizes = [1, 128], strides = [1, 1]} : vector<1x384xf32> to vector<1x128xf32>
      %15 = vector.extract_strided_slice %10 {offsets = [0, 256], sizes = [1, 128], strides = [1, 1]} : vector<1x384xf32> to vector<1x128xf32>
      %16 = vector.extract_strided_slice %12 {offsets = [0, 0], sizes = [1, 128], strides = [1, 1]} : vector<1x384xf32> to vector<1x128xf32>
      %17 = vector.extract_strided_slice %12 {offsets = [0, 128], sizes = [1, 128], strides = [1, 1]} : vector<1x384xf32> to vector<1x128xf32>
      %18 = vector.extract_strided_slice %12 {offsets = [0, 256], sizes = [1, 128], strides = [1, 1]} : vector<1x384xf32> to vector<1x128xf32>
      %19 = arith.addf %13, %16 : vector<1x128xf32>
      %20 = arith.negf %19 : vector<1x128xf32>
      %21 = math.exp %20 : vector<1x128xf32>
      %cst_11 = arith.constant 1.000000e+00 : f32
      %22 = vector.broadcast %cst_11 : f32 to vector<1x128xf32>
      %23 = arith.addf %22, %21 : vector<1x128xf32>
      %24 = arith.divf %22, %23 : vector<1x128xf32>
      %25 = arith.addf %14, %17 : vector<1x128xf32>
      %26 = arith.negf %25 : vector<1x128xf32>
      %27 = math.exp %26 : vector<1x128xf32>
      %cst_12 = arith.constant 1.000000e+00 : f32
      %28 = vector.broadcast %cst_12 : f32 to vector<1x128xf32>
      %29 = arith.addf %28, %27 : vector<1x128xf32>
      %30 = arith.divf %28, %29 : vector<1x128xf32>
      %31 = arith.mulf %24, %18 : vector<1x128xf32>
      %32 = arith.addf %15, %31 : vector<1x128xf32>
      %33 = math.tanh %32 : vector<1x128xf32>
      %cst_13 = arith.constant 1.000000e+00 : f32
      %34 = vector.broadcast %cst_13 : f32 to vector<1x128xf32>
      %35 = arith.subf %34, %30 : vector<1x128xf32>
      %36 = arith.mulf %35, %33 : vector<1x128xf32>
      %37 = arith.mulf %30, %arg8 : vector<1x128xf32>
      %38 = arith.addf %36, %37 : vector<1x128xf32>
      %39 = arith.index_cast %arg7 : i32 to index
      %c0_14 = arith.constant 0 : index
      %40 = vector.load %arg5[%39, %c0_14] : memref<8x128xf32, #tpu.memory_space<vmem>>, vector<1x128xf32>
      tpu.vector_store %arg5[%39, %c0_14], %38 {strides = array<i32>} : memref<8x128xf32, #tpu.memory_space<vmem>>, vector<1x128xf32>,
      scf.yield %38 : vector<1x128xf32>
    }
    %c8_i32_7 = arith.constant 8 : i32
    %c0_8 = arith.constant 0 : index
    %c0_9 = arith.constant 0 : index
    %8 = vector.load %arg6[%c0_8, %c0_9] : memref<1x128xf32, #tpu.memory_space<vmem>>, vector<1x128xf32>
    tpu.vector_store %arg6[%c0_8, %c0_9], %7 {strides = array<i32>} : memref<1x128xf32, #tpu.memory_space<vmem>>, vector<1x128xf32>,
    return
  }
  func.func @transform_0(%arg0: i32) -> (i32, i32) {
    %c0_i32 = arith.constant 0 : i32
    %c0_i32_0 = arith.constant 0 : i32
    return %arg0, %c0_i32 : i32, i32
  }
  func.func @transform_1(%arg0: i32) -> (i32, i32) {
    %c0_i32 = arith.constant 0 : i32
    %c0_i32_0 = arith.constant 0 : i32
    %c0_i32_1 = arith.constant 0 : i32
    return %c0_i32, %c0_i32_0 : i32, i32
  }
  func.func @transform_2(%arg0: i32) -> (i32, i32) {
    %c0_i32 = arith.constant 0 : i32
    %c0_i32_0 = arith.constant 0 : i32
    %c0_i32_1 = arith.constant 0 : i32
    return %c0_i32, %c0_i32_0 : i32, i32
  }
  func.func @transform_3(%arg0: i32) -> (i32, i32) {
    %c0_i32 = arith.constant 0 : i32
    %c0_i32_0 = arith.constant 0 : i32
    %c0_i32_1 = arith.constant 0 : i32
    return %c0_i32, %c0_i32_0 : i32, i32
  }
  func.func @transform_4(%arg0: i32) -> (i32, i32) {
    %c0_i32 = arith.constant 0 : i32
    %c0_i32_0 = arith.constant 0 : i32
    return %arg0, %c0_i32 : i32, i32
  }
}

</mosaic_0001>

<llo_original>
// kernel: tpu_custom_call.1
$region0: #{tpu_custom_call.1}
  #allocation0 [shape = 'u32[]', space=smem, size = 0x4, offset = 0x4, fixed_abs, tag = 'smem constant byte address 0x4 - core index']
  #allocation1 [shape = 'u32[144,128]{1,0:T(1,128)}', space=vmem, size = 0x12000, scoped, tag = 'internal scratch']
  #allocation2 [shape = 'f32[1,128]{1,0:T(1,128)}', space=vmem, size = 0x200, scoped, tag = 'scratch operand']
  %s0 = inlined_call_operand.hbm [shape: f32[8,384], index: 0, kind: input, shape index: {}]
  %s1 = inlined_call_operand.vmem [shape: f32[1,128], index: 1, kind: input, shape index: {}]
  %s2 = inlined_call_operand.hbm [shape: f32[128,384], index: 2, kind: input, shape index: {}]
  %s3 = inlined_call_operand.vmem [shape: f32[1,384], index: 3, kind: input, shape index: {}]
  %s4 = inlined_call_operand.hbm [shape: f32[8,128], index: 4, kind: output, shape index: {}]
  %s5 = sld [smem:[#allocation0]]
  $region45: #{tpu_custom_call.1} parent=0
    _
  %s7 = ssub.s32 1, %s5
  %s8 = scalar_select 0, %s7, %s5
  $region1: #{tpu_custom_call.1} parent=0
    #allocation3 [shape = 'u8[12288]{0}', space=vmem, size = 0x3000, scoped, tag = 'input window, operand 0, single buffered']
    #allocation4 [shape = 's32[1]{0}', space=sflag, size = 0x4, scoped, tag = 'scoped memory for tpu_custom_call.1']
    #allocation5 [shape = 's32[1]{0}', space=sflag, size = 0x4, scoped, tag = 'scoped memory for tpu_custom_call.1']
    #allocation6 [shape = 'u8[196608]{0}', space=vmem, size = 0x30000, scoped, tag = 'input window, operand 2, single buffered']
    #allocation7 [shape = 's32[1]{0}', space=sflag, size = 0x4, scoped, tag = 'scoped memory for tpu_custom_call.1']
    #allocation8 [shape = 'u8[4096]{0}', space=vmem, size = 0x1000, scoped, tag = 'output window, operand 0, single buffered']
    %9 = vsyncpa [#allocation4], 0
    %10 = vsyncpa [#allocation7], 0
    %11 = vsyncpa [#allocation5], 0
    // Predicated region
    $region2: #{tpu_custom_call.1} parent=1 // pred_check
      _
    $region3: #{tpu_custom_call.1} parent=1 // pred_check_branch
      %13 = sbr.rel (0) target = $region5
    $region4: #{tpu_custom_call.1} parent=1 // pred_region
      %s15 = ssub.s32 384, 384
      %16 = vsyncadd [#allocation4], %s15
      %s18 = sshll.u32 [#allocation3], 4
      %s19 = int_to_ptr.vmem [resolvable:$true] %s18
      %21 = dma.hbm_to_vmem [thread:$0]  %s0, 384, %s19, [#allocation4]
    $region5: #{tpu_custom_call.1} parent=1 // pred_fallthru
      _
    // Predicated region
    $region6: #{tpu_custom_call.1} parent=1 // pred_check
      _
    $region7: #{tpu_custom_call.1} parent=1 // pred_check_branch
      %23 = sbr.rel (0) target = $region9
    $region8: #{tpu_custom_call.1} parent=1 // pred_region
      _
    $region9: #{tpu_custom_call.1} parent=1 // pred_fallthru
      _
    // Predicated region
    $region10: #{tpu_custom_call.1} parent=1 // pred_check
      _
    $region11: #{tpu_custom_call.1} parent=1 // pred_check_branch
      %25 = sbr.rel (0) target = $region13
    $region12: #{tpu_custom_call.1} parent=1 // pred_region
      %s27 = ssub.s32 6144, 6144
      %28 = vsyncadd [#allocation7], %s27
      %s29 = sshll.u32 [#allocation6], 4
      %s30 = int_to_ptr.vmem [resolvable:$true] %s29
      %35 = dma.hbm_to_vmem [thread:$0]  %s2, 6144, %s30, [#allocation7], 384, 384, 24
    $region13: #{tpu_custom_call.1} parent=1 // pred_fallthru
      _
    // Predicated region
    $region14: #{tpu_custom_call.1} parent=1 // pred_check
      _
    $region15: #{tpu_custom_call.1} parent=1 // pred_check_branch
      %37 = sbr.rel (0) target = $region17
    $region16: #{tpu_custom_call.1} parent=1 // pred_region
      _
    $region17: #{tpu_custom_call.1} parent=1 // pred_fallthru
      _
    // Predicated region
    $region18: #{tpu_custom_call.1} parent=1 // pred_check
      _
    $region19: #{tpu_custom_call.1} parent=1 // pred_check_branch
      %39 = sbr.rel (0) target = $region21
    $region20: #{tpu_custom_call.1} parent=1 // pred_region
      %40 = dma.done [#allocation4], 384
    $region21: #{tpu_custom_call.1} parent=1 // pred_fallthru
      _
    // Predicated region
    $region22: #{tpu_custom_call.1} parent=1 // pred_check
      _
    $region23: #{tpu_custom_call.1} parent=1 // pred_check_branch
      %42 = sbr.rel (0) target = $region25
    $region24: #{tpu_custom_call.1} parent=1 // pred_region
      %43 = dma.done [#allocation7], 6144
    $region25: #{tpu_custom_call.1} parent=1 // pred_fallthru
      _
    %p44 = scmp.eq.s32.totalorder 0, 0
    // Predicated region
    $region26: #{tpu_custom_call.1} parent=1 // pred_check
      %p45 = pneg %p44
    $region27: #{tpu_custom_call.1} parent=1 // pred_check_branch
      %47 = sbr.rel (%p45) target = $region29
    $region28: #{tpu_custom_call.1} parent=1 // pred_region
      %v48 = vld [vmem:[%s1] sm:$0x1]
      %49 = vst [vmem:[#allocation2] sm:$0x1] %v48
    $region29: #{tpu_custom_call.1} parent=1 // pred_fallthru
      _
    %v50 = vld [vmem:[#allocation6] sm:$0xff]
    %v51 = vld [vmem:[#allocation6 + $0x8] sm:$0xff]
    %v52 = vld [vmem:[#allocation6 + $0x10] sm:$0xff]
    %v53 = vld [vmem:[#allocation6 + $0x18] sm:$0xff]
    %v54 = vld [vmem:[#allocation6 + $0x20] sm:$0xff]
    %v55 = vld [vmem:[#allocation6 + $0x28] sm:$0xff]
    %v56 = vld [vmem:[#allocation6 + $0x30] sm:$0xff]
    %v57 = vld [vmem:[#allocation6 + $0x38] sm:$0xff]
    %v58 = vld [vmem:[#allocation6 + $0x40] sm:$0xff]
    %v59 = vld [vmem:[#allocation6 + $0x48] sm:$0xff]
    %v60 = vld [vmem:[#allocation6 + $0x50] sm:$0xff]
    %v61 = vld [vmem:[#allocation6 + $0x58] sm:$0xff]
    %v62 = vld [vmem:[#allocation6 + $0x60] sm:$0xff]
    %v63 = vld [vmem:[#allocation6 + $0x68] sm:$0xff]
    %v64 = vld [vmem:[#allocation6 + $0x70] sm:$0xff]
    %v65 = vld [vmem:[#allocation6 + $0x78] sm:$0xff]
    %v66 = vld [vmem:[#allocation6 + $0x80] sm:$0xff]
    %v67 = vld [vmem:[#allocation6 + $0x88] sm:$0xff]
    %v68 = vld [vmem:[#allocation6 + $0x90] sm:$0xff]
    %v69 = vld [vmem:[#allocation6 + $0x98] sm:$0xff]
    %v70 = vld [vmem:[#allocation6 + $0xa0] sm:$0xff]
    %v71 = vld [vmem:[#allocation6 + $0xa8] sm:$0xff]
    %v72 = vld [vmem:[#allocation6 + $0xb0] sm:$0xff]
    %v73 = vld [vmem:[#allocation6 + $0xb8] sm:$0xff]
    %v74 = vld [vmem:[#allocation6 + $0xc0] sm:$0xff]
    %v75 = vld [vmem:[#allocation6 + $0xc8] sm:$0xff]
    %v76 = vld [vmem:[#allocation6 + $0xd0] sm:$0xff]
    %v77 = vld [vmem:[#allocation6 + $0xd8] sm:$0xff]
    %v78 = vld [vmem:[#allocation6 + $0xe0] sm:$0xff]
    %v79 = vld [vmem:[#allocation6 + $0xe8] sm:$0xff]
    %v80 = vld [vmem:[#allocation6 + $0xf0] sm:$0xff]
    %v81 = vld [vmem:[#allocation6 + $0xf8] sm:$0xff]
    %v82 = vld [vmem:[#allocation6 + $0x100] sm:$0xff]
    %v83 = vld [vmem:[#allocation6 + $0x108] sm:$0xff]
    %v84 = vld [vmem:[#allocation6 + $0x110] sm:$0xff]
    %v85 = vld [vmem:[#allocation6 + $0x118] sm:$0xff]
    %v86 = vld [vmem:[#allocation6 + $0x120] sm:$0xff]
    %v87 = vld [vmem:[#allocation6 + $0x128] sm:$0xff]
    %v88 = vld [vmem:[#allocation6 + $0x130] sm:$0xff]
    %v89 = vld [vmem:[#allocation6 + $0x138] sm:$0xff]
    %v90 = vld [vmem:[#allocation6 + $0x140] sm:$0xff]
    %v91 = vld [vmem:[#allocation6 + $0x148] sm:$0xff]
    %v92 = vld [vmem:[#allocation6 + $0x150] sm:$0xff]
    %v93 = vld [vmem:[#allocation6 + $0x158] sm:$0xff]
    %v94 = vld [vmem:[#allocation6 + $0x160] sm:$0xff]
    %v95 = vld [vmem:[#allocation6 + $0x168] sm:$0xff]
    %v96 = vld [vmem:[#allocation6 + $0x170] sm:$0xff]
    %v97 = vld [vmem:[#allocation6 + $0x178] sm:$0xff]
    %v98 = vld [vmem:[%s3] sm:$0x7]
    %v99 = vld [vmem:[#allocation2] sm:$0x1]
    loop: start=0, step=1, limit=8
    $region30: #{tpu_custom_call.1} parent=1 // loop_pre_header
      _
    $region31: #{tpu_custom_call.1} parent=1 // loop_header
      %s101 = sphi 0, %s105
      %p102 = scmp.ge.s32.totalorder %s101, 8
      %v106 = vphi %v99, %v298
    $region32: #{tpu_custom_call.1} parent=1 // loop_header_branch
      %104 = sbr.rel (%p102) target = $region36
    $region33: #{tpu_custom_call.1} parent=1 // loop_body
      %s107 = sshra.s32 %s101, 3
      %s108 = sand.u32 %s101, 7
      %s109 = sshra.s32 %s101, 3
      %s110 = sand.u32 %s101, 7
      %s111 = smul.u32 %s107, 3
      %s112 = smul.u32 %s111, 8
      %s113 = sadd.s32 %s112, %s110
      %s114 = scalar_lea.vmem [#allocation3], %s113
      %v115 = vld [vmem:[%s114] ss:$8 sm:$0x7]
      %v117 = vlaneseq
      %v118 = vshrl.u32 %v117, 7
      %v119 = vsub.s32 0, %v118
      %v120 = vrot.slane %v98, %v119
      %v121 = vlaneseq
      %v122 = vshrl.u32 %v121, 7
      %v123 = vsub.s32 1, %v122
      %v124 = vrot.slane %v98, %v123
      %v125 = vlaneseq
      %v126 = vshrl.u32 %v125, 7
      %v127 = vsub.s32 2, %v126
      %v128 = vrot.slane %v98, %v127
      %132 = vmatprep.subr.mxu0 %v51
      %133 = vmatpush1.msra.mxu0 %v50
      %134 = vmatprep.subr.mxu0 %v54
      %135 = vmatpush1.msra.mxu0 %v53
      %136 = vmatprep.subr.mxu0 %v57
      %137 = vmatpush1.msra.mxu0 %v56
      %138 = vmatprep.subr.mxu0 %v60
      %139 = vmatpush1.msra.mxu0 %v59
      %140 = vmatprep.subr.mxu0 %v63
      %141 = vmatpush1.msra.mxu0 %v62
      %142 = vmatprep.subr.mxu0 %v66
      %143 = vmatpush1.msra.mxu0 %v65
      %144 = vmatprep.subr.mxu0 %v69
      %145 = vmatpush1.msra.mxu0 %v68
      %146 = vmatprep.subr.mxu0 %v72
      %147 = vmatpush1.msra.mxu0 %v71
      %148 = vmatprep.subr.mxu0 %v75
      %149 = vmatpush1.msra.mxu0 %v74
      %150 = vmatprep.subr.mxu0 %v78
      %151 = vmatpush1.msra.mxu0 %v77
      %152 = vmatprep.subr.mxu0 %v81
      %153 = vmatpush1.msra.mxu0 %v80
      %154 = vmatprep.subr.mxu0 %v84
      %155 = vmatpush1.msra.mxu0 %v83
      %156 = vmatprep.subr.mxu0 %v87
      %157 = vmatpush1.msra.mxu0 %v86
      %158 = vmatprep.subr.mxu0 %v90
      %159 = vmatpush1.msra.mxu0 %v89
      %160 = vmatprep.subr.mxu0 %v93
      %161 = vmatpush1.msra.mxu0 %v92
      %162 = vmatprep.subr.mxu0 %v96
      %163 = vmatpush1.msra.mxu0 %v95
      %164 = vmatprep.subr.mxu0 0.0
      %165 = vmatpush1.msra.mxu0 0.0
      %166 = vmatprep.subr.mxu0 0.0
      %167 = vmatpush1.msra.mxu0 0.0
      %168 = vmatprep.subr.mxu0 0.0
      %169 = vmatpush1.msra.mxu0 0.0
      %170 = vmatprep.subr.mxu0 0.0
      %171 = vmatpush1.msra.mxu0 0.0
      %172 = vmatprep.subr.mxu0 0.0
      %173 = vmatpush1.msra.mxu0 0.0
      %174 = vmatprep.subr.mxu0 0.0
      %175 = vmatpush1.msra.mxu0 0.0
      %176 = vmatprep.subr.mxu0 0.0
      %177 = vmatpush1.msra.mxu0 0.0
      %178 = vmatprep.subr.mxu0 0.0
      %179 = vmatpush1.msra.mxu0 0.0
      %180 = vmatprep.subr.mxu0 0.0
      %181 = vmatpush1.msra.mxu0 0.0
      %182 = vmatprep.subr.mxu0 0.0
      %183 = vmatpush1.msra.mxu0 0.0
      %184 = vmatprep.subr.mxu0 0.0
      %185 = vmatpush1.msra.mxu0 0.0
      %186 = vmatprep.subr.mxu0 0.0
      %187 = vmatpush1.msra.mxu0 0.0
      %188 = vmatprep.subr.mxu0 0.0
      %189 = vmatpush1.msra.mxu0 0.0
      %190 = vmatprep.subr.mxu0 0.0
      %191 = vmatpush1.msra.mxu0 0.0
      %192 = vmatprep.subr.mxu0 0.0
      %193 = vmatpush1.msra.mxu0 0.0
      %194 = vmatprep.subr.mxu0 0.0
      %195 = vmatpush1.msra.mxu0 0.0
      %196 = vmatprep.mubr.f32.mxu0 0.0
      %197 = vmatmul.mubr.f32.gmra.mrb[0].mxu0 %v106
      %v198 = vpop.f32.mrb[0].mxu0
      %v199 = vadd.f32 %v120, %v198
      %v200 = vpop.f32.mrb[0].mxu0
      %v201 = vadd.f32 %v124, %v200
      %202 = vdwg.mxu0
      %203 = vmatprep.subr.mxu0 0.0
      %204 = vmatpush1.msra.mxu0 %v52
      %205 = vmatprep.subr.mxu0 0.0
      %206 = vmatpush1.msra.mxu0 %v55
      %207 = vmatprep.subr.mxu0 0.0
      %208 = vmatpush1.msra.mxu0 %v58
      %209 = vmatprep.subr.mxu0 0.0
      %210 = vmatpush1.msra.mxu0 %v61
      %211 = vmatprep.subr.mxu0 0.0
      %212 = vmatpush1.msra.mxu0 %v64
      %213 = vmatprep.subr.mxu0 0.0
      %214 = vmatpush1.msra.mxu0 %v67
      %215 = vmatprep.subr.mxu0 0.0
      %216 = vmatpush1.msra.mxu0 %v70
      %217 = vmatprep.subr.mxu0 0.0
      %218 = vmatpush1.msra.mxu0 %v73
      %219 = vmatprep.subr.mxu0 0.0
      %220 = vmatpush1.msra.mxu0 %v76
      %221 = vmatprep.subr.mxu0 0.0
      %222 = vmatpush1.msra.mxu0 %v79
      %223 = vmatprep.subr.mxu0 0.0
      %224 = vmatpush1.msra.mxu0 %v82
      %225 = vmatprep.subr.mxu0 0.0
      %226 = vmatpush1.msra.mxu0 %v85
      %227 = vmatprep.subr.mxu0 0.0
      %228 = vmatpush1.msra.mxu0 %v88
      %229 = vmatprep.subr.mxu0 0.0
      %230 = vmatpush1.msra.mxu0 %v91
      %231 = vmatprep.subr.mxu0 0.0
      %232 = vmatpush1.msra.mxu0 %v94
      %233 = vmatprep.subr.mxu0 0.0
      %234 = vmatpush1.msra.mxu0 %v97
      %235 = vmatprep.subr.mxu0 0.0
      %236 = vmatpush1.msra.mxu0 0.0
      %237 = vmatprep.subr.mxu0 0.0
      %238 = vmatpush1.msra.mxu0 0.0
      %239 = vmatprep.subr.mxu0 0.0
      %240 = vmatpush1.msra.mxu0 0.0
      %241 = vmatprep.subr.mxu0 0.0
      %242 = vmatpush1.msra.mxu0 0.0
      %243 = vmatprep.subr.mxu0 0.0
      %244 = vmatpush1.msra.mxu0 0.0
      %245 = vmatprep.subr.mxu0 0.0
      %246 = vmatpush1.msra.mxu0 0.0
      %247 = vmatprep.subr.mxu0 0.0
      %248 = vmatpush1.msra.mxu0 0.0
      %249 = vmatprep.subr.mxu0 0.0
      %250 = vmatpush1.msra.mxu0 0.0
      %251 = vmatprep.subr.mxu0 0.0
      %252 = vmatpush1.msra.mxu0 0.0
      %253 = vmatprep.subr.mxu0 0.0
      %254 = vmatpush1.msra.mxu0 0.0
      %255 = vmatprep.subr.mxu0 0.0
      %256 = vmatpush1.msra.mxu0 0.0
      %257 = vmatprep.subr.mxu0 0.0
      %258 = vmatpush1.msra.mxu0 0.0
      %259 = vmatprep.subr.mxu0 0.0
      %260 = vmatpush1.msra.mxu0 0.0
      %261 = vmatprep.subr.mxu0 0.0
      %262 = vmatpush1.msra.mxu0 0.0
      %263 = vmatprep.subr.mxu0 0.0
      %264 = vmatpush1.msra.mxu0 0.0
      %265 = vmatprep.subr.mxu0 0.0
      %266 = vmatpush1.msra.mxu0 0.0
      %267 = vmatprep.mubr.f32.mxu0 0.0
      %268 = vmatmul.mubr.f32.gmra.mrb[0].mxu0 %v106
      %v269 = vpop.f32.mrb[0].mxu0
      %v270 = vadd.f32 %v128, %v269
      %v271 = vpop.f32.mrb[0].mxu0
      %272 = vdwg.mxu0
      %v273 = vadd.f32 %v115, %v199
      %v274 = vxor.u32 %v273, 2147483648
      %v275 = vmul.f32 %v274, 1.442695
      %v276 = vpow.pop %v275
      %v277 = vadd.f32 %v276, 1.0
      %v278 = vrcp.pop %v277
      %v279 = vmul.f32 1.0, %v278
      %v281 = vrot.slane %v115, 1
      %v283 = vadd.f32 %v281, %v201
      %v284 = vxor.u32 %v283, 2147483648
      %v285 = vmul.f32 %v284, 1.442695
      %v286 = vpow.pop %v285
      %v287 = vadd.f32 %v286, 1.0
      %v288 = vrcp.pop %v287
      %v289 = vmul.f32 1.0, %v288
      %v290 = vmul.f32 %v279, %v270
      %v291 = vrot.slane %v115, 2
      %v293 = vadd.f32 %v291, %v290
      %v294 = vtanh.pop %v293
      %v295 = vsub.f32 1.0, %v289
      %v296 = vmul.f32 %v295, %v294
      %v297 = vmul.f32 %v289, %v106
      %v298 = vadd.f32 %v296, %v297
      %s299 = scalar_lea.vmem [#allocation8], %s101
      %300 = vst [vmem:[%s299] sm:$0x1] %v298
    $region34: #{tpu_custom_call.1} parent=1 // loop_footer
      %s105 = sadd.s32 1, %s101
    $region35: #{tpu_custom_call.1} parent=1 // loop_footer_branch
      %100 = sbr.rel target = $region31
    $region36: #{tpu_custom_call.1} parent=1 // loop_exit
      _
    %301 = vst [vmem:[#allocation2] sm:$0x1] %v106
    // Predicated region
    $region37: #{tpu_custom_call.1} parent=1 // pred_check
      _
    $region38: #{tpu_custom_call.1} parent=1 // pred_check_branch
      %303 = sbr.rel (0) target = $region40
    $region39: #{tpu_custom_call.1} parent=1 // pred_region
      %s305 = ssub.s32 128, 128
      %306 = vsyncadd [#allocation5], %s305
      %s308 = sshll.u32 [#allocation8], 4
      %s309 = int_to_ptr.vmem [resolvable:$true] %s308
      %311 = dma.vmem_to_hbm [thread:$0]  %s309, 128, %s4, [#allocation5]
    $region40: #{tpu_custom_call.1} parent=1 // pred_fallthru
      _
    // Predicated region
    $region41: #{tpu_custom_call.1} parent=1 // pred_check
      _
    $region42: #{tpu_custom_call.1} parent=1 // pred_check_branch
      %313 = sbr.rel (0) target = $region44
    $region43: #{tpu_custom_call.1} parent=1 // pred_region
      %314 = dma.done [#allocation5], 128
    $region44: #{tpu_custom_call.1} parent=1 // pred_fallthru
      _
    %315 = vsyncpa [#allocation4], 1
    %316 = vsyncpa [#allocation7], 1
    %317 = vsyncpa [#allocation5], 1

</llo_original>
